<compile_context>
chip_gen: v7x
topology: tpu7x:2x2x1
jax: 0.10.0
libtpu: 0.0.40
codegen_flags: <defaults>
</compile_context>

<pallas_src>
import math

import jax
import jax.numpy as jnp
from jax.experimental import pallas as pl
from jax.experimental.pallas import tpu as pltpu


def _mf_score_kernel(u_ref, p_ref, n_ref, out_ref):
    """Row-wise dot products, packed lane-dense.

    out_ref block is (2, tb):
      row 0 -> p_score = sum(u * p, axis=-1)
      row 1 -> n_score = sum(u * n, axis=-1)
    """
    u = u_ref[...]
    p = p_ref[...]
    n = n_ref[...]
    if u.dtype != jnp.float32:  # only cast when tables are stored narrower
        u = u.astype(jnp.float32)
        p = p.astype(jnp.float32)
        n = n.astype(jnp.float32)

    ps = jnp.sum(u * p, axis=1)  # (tb,)
    ns = jnp.sum(u * n, axis=1)  # (tb,)
    # Pack both score vectors into a single lane-dense (2, tb) store.
    out_ref[...] = jnp.stack([ps, ns], axis=0).astype(out_ref.dtype)


def _pick_batch_tile(batch, emb, itemsize, *,
                     target_block_bytes=1 << 20, max_tb=2048):
    """Largest batch tile (multiple of 128) with ~1 MiB input blocks.

    3 inputs x 2 pipeline buffers x 1 MiB ~= 6 MiB of VMEM, safe under the
    v5e 16 MiB / v6e 32 MiB / v7x 32 MiB scoped limits.  Shrinks the tile so
    the grid has >= 2 steps when possible (v7x has 2 TensorCores).
    """
    tb = max(128, min(max_tb, target_block_bytes // max(1, emb * itemsize)))
    tb = max(128, (tb // 128) * 128)          # lane-dense output requires x128
    while tb > 128 and pl.cdiv(batch, tb) < 2:
        tb = max(128, ((tb // 2) // 128) * 128)
    return tb


def mf_forward(users, items, user_idx, item_p_idx, item_n_idx, *, tb=None):
    """MF.forward: returns (p_score, n_score), each shape (B,) float32."""
    B = user_idx.shape[0]
    E = users.shape[1]
    if tb is None:
        tb = _pick_batch_tile(B, E, jnp.dtype(users.dtype).itemsize)

    # Pad the batch (indices, not data) up to a tile multiple; padded rows
    # gather row 0 and are sliced off at the end.
    Bp = pl.cdiv(B, tb) * tb
    if Bp != B:
        pad = Bp - B
        def _pad(ix):
            return jnp.concatenate([ix, jnp.zeros((pad,), ix.dtype)])
        user_idx = _pad(user_idx)
        item_p_idx = _pad(item_p_idx)
        item_n_idx = _pad(item_n_idx)

    # Glue: embedding gathers (data-dependent row selection) stay in XLA.
    u = jnp.take(users, user_idx, axis=0)      # (Bp, E)
    p = jnp.take(items, item_p_idx, axis=0)    # (Bp, E)
    n = jnp.take(items, item_n_idx, axis=0)    # (Bp, E)

    row_spec = pl.BlockSpec((tb, E), lambda i: (i, 0))
    out_spec = pl.BlockSpec((2, tb), lambda i: (0, i))   # lane-dense scores

    scores = pl.pallas_call(
        _mf_score_kernel,
        out_shape=jax.ShapeDtypeStruct((2, Bp), jnp.float32),
        grid_spec=pltpu.PrefetchScalarGridSpec(
            num_scalar_prefetch=0,
            grid=(Bp // tb,),
            in_specs=[row_spec, row_spec, row_spec],
            out_specs=out_spec,
        ),
        compiler_params=pltpu.CompilerParams(
            dimension_semantics=("parallel",),
            vmem_limit_bytes=32 * 1024 * 1024,
        ),
    )(u, p, n)

    return scores[0, :B], scores[1, :B]


def init_mf_params(key, num_users, num_items, embedding_size):
    """Matches PyTorch init: uniform(-stdv, stdv), stdv = 1/sqrt(E)."""
    stdv = 1.0 / math.sqrt(embedding_size)
    k_u, k_i = jax.random.split(key)
    users = jax.random.uniform(
        k_u, (num_users, embedding_size), jnp.float32, minval=-stdv, maxval=stdv)
    items = jax.random.uniform(
        k_i, (num_items, embedding_size), jnp.float32, minval=-stdv, maxval=stdv)
    return users, items


if __name__ == "__main__":
    key = jax.random.PRNGKey(0)

    num_users, num_items, embedding_size = 64, 128, 64
    batch = 300  # deliberately not a multiple of the tile -> exercises padding

    k_params, k_u_idx, k_p_idx, k_n_idx = jax.random.split(key, 4)
    users, items = init_mf_params(k_params, num_users, num_items, embedding_size)

    user_idx = jax.random.randint(k_u_idx, (batch,), 0, num_users, dtype=jnp.int32)
    item_p_idx = jax.random.randint(k_p_idx, (batch,), 0, num_items, dtype=jnp.int32)
    item_n_idx = jax.random.randint(k_n_idx, (batch,), 0, num_items, dtype=jnp.int32)

    p_score, n_score = mf_forward(users, items, user_idx, item_p_idx, item_n_idx)
    jax.block_until_ready((p_score, n_score))

    # Cross-check against a pure-JAX reference of the same math.
    u_ref = users[user_idx]
    p_ref_e = items[item_p_idx]
    n_ref_e = items[item_n_idx]
    p_expect = jnp.sum(u_ref * p_ref_e, axis=1)
    n_expect = jnp.sum(u_ref * n_ref_e, axis=1)
    assert p_score.shape == (batch,) and n_score.shape == (batch,)
    assert jnp.allclose(p_score, p_expect, atol=1e-5, rtol=1e-5)
    assert jnp.allclose(n_score, n_expect, atol=1e-5, rtol=1e-5)

    print("KERNEL_OK")
</pallas_src>

<mosaic_0001>
module attributes {stable_mosaic.version = 11 : i64} {
  func.func @_mf_score_kernel(%arg0: i32, %arg1: memref<256x64xf32, #tpu.memory_space<vmem>>, %arg2: memref<256x64xf32, #tpu.memory_space<vmem>>, %arg3: memref<256x64xf32, #tpu.memory_space<vmem>>, %arg4: memref<2x256xf32, #tpu.memory_space<vmem>>) attributes {dimension_semantics = [#tpu.dimension_semantics<parallel>], iteration_bounds = array<i64: 2>, scalar_prefetch = 0 : i64, scratch_operands = 0 : i64, tpu.core_type = #tpu.core_type<tc>, window_params = [{transform_indices = @transform_0, window_bounds = array<i64: 256, 64>}, {transform_indices = @transform_1, window_bounds = array<i64: 256, 64>}, {transform_indices = @transform_2, window_bounds = array<i64: 256, 64>}, {transform_indices = @transform_3, window_bounds = array<i64: 2, 256>}]} {
    %c0 = arith.constant 0 : index
    %c0_0 = arith.constant 0 : index
    %0 = vector.load %arg1[%c0, %c0_0] : memref<256x64xf32, #tpu.memory_space<vmem>>, vector<256x64xf32>
    %c0_1 = arith.constant 0 : index
    %c0_2 = arith.constant 0 : index
    %1 = vector.load %arg2[%c0_1, %c0_2] : memref<256x64xf32, #tpu.memory_space<vmem>>, vector<256x64xf32>
    %c0_3 = arith.constant 0 : index
    %c0_4 = arith.constant 0 : index
    %2 = vector.load %arg3[%c0_3, %c0_4] : memref<256x64xf32, #tpu.memory_space<vmem>>, vector<256x64xf32>
    %3 = arith.mulf %0, %1 : vector<256x64xf32>
    %cst = arith.constant dense<0.000000e+00> : vector<256xf32>
    %4 = vector.multi_reduction <add>, %3, %cst [1] : vector<256x64xf32> to vector<256xf32>
    %5 = arith.mulf %0, %2 : vector<256x64xf32>
    %cst_5 = arith.constant dense<0.000000e+00> : vector<256xf32>
    %6 = vector.multi_reduction <add>, %5, %cst_5 [1] : vector<256x64xf32> to vector<256xf32>
    %7 = vector.shape_cast %4 : vector<256xf32> to vector<1x256xf32>
    %8 = vector.shape_cast %6 : vector<256xf32> to vector<1x256xf32>
    %9 = tpu.concatenate %7, %8 in 0 : vector<1x256xf32>, vector<1x256xf32> -> vector<2x256xf32>
    %c0_6 = arith.constant 0 : index
    %c0_7 = arith.constant 0 : index
    %10 = vector.load %arg4[%c0_6, %c0_7] : memref<2x256xf32, #tpu.memory_space<vmem>>, vector<2x256xf32>
    tpu.vector_store %arg4[%c0_6, %c0_7], %9 {strides = array<i32>} : memref<2x256xf32, #tpu.memory_space<vmem>>, vector<2x256xf32>,
    return
  }
  func.func @transform_0(%arg0: i32) -> (i32, i32) {
    %c0_i32 = arith.constant 0 : i32
    %c0_i32_0 = arith.constant 0 : i32
    return %arg0, %c0_i32 : i32, i32
  }
  func.func @transform_1(%arg0: i32) -> (i32, i32) {
    %c0_i32 = arith.constant 0 : i32
    %c0_i32_0 = arith.constant 0 : i32
    return %arg0, %c0_i32 : i32, i32
  }
  func.func @transform_2(%arg0: i32) -> (i32, i32) {
    %c0_i32 = arith.constant 0 : i32
    %c0_i32_0 = arith.constant 0 : i32
    return %arg0, %c0_i32 : i32, i32
  }
  func.func @transform_3(%arg0: i32) -> (i32, i32) {
    %c0_i32 = arith.constant 0 : i32
    %c0_i32_0 = arith.constant 0 : i32
    return %c0_i32, %arg0 : i32, i32
  }
}

</mosaic_0001>

<llo_original>
// kernel: tpu_custom_call.1
$region0: #{tpu_custom_call.1}
  #allocation0 [shape = 'u32[]', space=smem, size = 0x4, offset = 0x4, fixed_abs, tag = 'smem constant byte address 0x4 - core index']
  #allocation1 [shape = 'u32[144,128]{1,0:T(1,128)}', space=vmem, size = 0x12000, scoped, tag = 'internal scratch']
  %s0 = inlined_call_operand.vmem [shape: f32[512,64], index: 0, kind: input, shape index: {}]
  %s1 = inlined_call_operand.vmem [shape: f32[512,64], index: 1, kind: input, shape index: {}]
  %s2 = inlined_call_operand.vmem [shape: f32[512,64], index: 2, kind: input, shape index: {}]
  %s3 = inlined_call_operand.hbm [shape: f32[2,512], index: 3, kind: output, shape index: {}]
  %s4 = sld [smem:[#allocation0]]
  $region45: #{tpu_custom_call.1} parent=0
    _
  %s6 = ssub.s32 1, %s4
  %s7 = scalar_select 0, %s6, %s4
  $region1: #{tpu_custom_call.1} parent=0
    #allocation2 [shape = 'u8[4096]{0}', space=vmem, size = 0x1000, scoped, tag = 'output window, operand 0']
    #allocation3 [shape = 's32[2]{0}', space=sflag, size = 0x8, scoped, tag = 'scoped memory for tpu_custom_call.1']
    %8 = vsyncpa [#allocation3], 0
    %s9 = scalar_lea.sflag [#allocation3], 1
    %10 = vsyncpa %s9, 0
    loop: start=0, step=1, limit=4
    $region2: #{tpu_custom_call.1} parent=1 // loop_pre_header
      _
    $region3: #{tpu_custom_call.1} parent=1 // loop_header
      %s12 = sphi 0, %s16
      %p13 = scmp.ge.s32.totalorder %s12, 4
      %s22 = sphi 0, %s24
      %s25 = sphi 0, %s22
      %s26 = sphi 0, %s25
      %s42 = sphi 0, %s26
      %s48 = sphi 0, %s50
      %s51 = sphi 0, %s48
      %s52 = sphi 0, %s51
      %s68 = sphi 0, %s52
      %s74 = sphi 0, %s76
      %s77 = sphi 0, %s74
      %s78 = sphi 0, %s77
      %s94 = sphi 0, %s78
      %s100 = sphi 0, %s102
      %s103 = sphi 0, %s100
      %s104 = sphi 0, %s103
      %s120 = sphi 0, %s104
    $region4: #{tpu_custom_call.1} parent=1 // loop_header_branch
      %15 = sbr.rel (%p13) target = $region8
    $region5: #{tpu_custom_call.1} parent=1 // loop_body
      %s17 = ssub.s32 %s12, 1
      %s18 = ssub.s32 %s12, 2
      %s19 = sadd.s32 %s12, 1
      %s20 = ssub.s32 %s12, %s19
      %p21 = scmp.eq.s32.totalorder %s20, 0
      %s23 = sadd.s32 %s22, 1
      %s24 = scalar_select %p21, %s22, %s23
      %p27 = pneg %p21
      %p28 = scmp.eq.s32.totalorder %s12, 1
      %p29 = por %p27, %p28
      %p30 = scmp.ne.s32.totalorder %s22, %s25
      %p31 = scmp.eq.s32.totalorder %s12, 0
      %p32 = por %p30, %p31
      %p33 = scmp.ne.s32.totalorder %s22, %s25
      %p34 = scmp.eq.s32.totalorder %s17, 1
      %p35 = por %p33, %p34
      %p36 = scmp.ne.s32.totalorder %s25, %s26
      %p37 = scmp.eq.s32.totalorder %s17, 0
      %p38 = por %p36, %p37
      %p39 = scmp.ne.s32.totalorder %s25, %s26
      %p40 = scmp.eq.s32.totalorder %s18, 1
      %p41 = por %p39, %p40
      %p43 = scmp.ne.s32.totalorder %s26, %s42
      %p44 = scmp.eq.s32.totalorder %s18, 0
      %p45 = por %p43, %p44
      %s46 = ssub.s32 %s12, %s19
      %p47 = scmp.eq.s32.totalorder %s46, 0
      %s49 = sadd.s32 %s48, 1
      %s50 = scalar_select %p47, %s48, %s49
      %p53 = pneg %p47
      %p54 = scmp.eq.s32.totalorder %s12, 1
      %p55 = por %p53, %p54
      %p56 = scmp.ne.s32.totalorder %s48, %s51
      %p57 = scmp.eq.s32.totalorder %s12, 0
      %p58 = por %p56, %p57
      %p59 = scmp.ne.s32.totalorder %s48, %s51
      %p60 = scmp.eq.s32.totalorder %s17, 1
      %p61 = por %p59, %p60
      %p62 = scmp.ne.s32.totalorder %s51, %s52
      %p63 = scmp.eq.s32.totalorder %s17, 0
      %p64 = por %p62, %p63
      %p65 = scmp.ne.s32.totalorder %s51, %s52
      %p66 = scmp.eq.s32.totalorder %s18, 1
      %p67 = por %p65, %p66
      %p69 = scmp.ne.s32.totalorder %s52, %s68
      %p70 = scmp.eq.s32.totalorder %s18, 0
      %p71 = por %p69, %p70
      %s72 = ssub.s32 %s12, %s19
      %p73 = scmp.eq.s32.totalorder %s72, 0
      %s75 = sadd.s32 %s74, 1
      %s76 = scalar_select %p73, %s74, %s75
      %p79 = pneg %p73
      %p80 = scmp.eq.s32.totalorder %s12, 1
      %p81 = por %p79, %p80
      %p82 = scmp.ne.s32.totalorder %s74, %s77
      %p83 = scmp.eq.s32.totalorder %s12, 0
      %p84 = por %p82, %p83
      %p85 = scmp.ne.s32.totalorder %s74, %s77
      %p86 = scmp.eq.s32.totalorder %s17, 1
      %p87 = por %p85, %p86
      %p88 = scmp.ne.s32.totalorder %s77, %s78
      %p89 = scmp.eq.s32.totalorder %s17, 0
      %p90 = por %p88, %p89
      %p91 = scmp.ne.s32.totalorder %s77, %s78
      %p92 = scmp.eq.s32.totalorder %s18, 1
      %p93 = por %p91, %p92
      %p95 = scmp.ne.s32.totalorder %s78, %s94
      %p96 = scmp.eq.s32.totalorder %s18, 0
      %p97 = por %p95, %p96
      %s98 = ssub.s32 %s12, %s19
      %p99 = scmp.eq.s32.totalorder %s98, 0
      %s101 = sadd.s32 %s100, 1
      %s102 = scalar_select %p99, %s100, %s101
      %p105 = pneg %p99
      %p106 = scmp.eq.s32.totalorder %s12, 1
      %p107 = por %p105, %p106
      %p108 = scmp.ne.s32.totalorder %s100, %s103
      %p109 = scmp.eq.s32.totalorder %s12, 0
      %p110 = por %p108, %p109
      %p111 = scmp.ne.s32.totalorder %s100, %s103
      %p112 = scmp.eq.s32.totalorder %s17, 1
      %p113 = por %p111, %p112
      %p114 = scmp.ne.s32.totalorder %s103, %s104
      %p115 = scmp.eq.s32.totalorder %s17, 0
      %p116 = por %p114, %p115
      %p117 = scmp.ne.s32.totalorder %s103, %s104
      %p118 = scmp.eq.s32.totalorder %s18, 1
      %p119 = por %p117, %p118
      %p121 = scmp.ne.s32.totalorder %s104, %s120
      %p122 = scmp.eq.s32.totalorder %s18, 0
      %p123 = por %p121, %p122
      %p124 = scmp.le.s32.totalorder 1, %s12
      %p125 = scmp.lt.s32.totalorder %s12, 3
      %p126 = pnand %p124, %p125
      %p127 = pneg %p126
      // Predicated region
      $region9: #{tpu_custom_call.1} parent=5 // pred_check
        _
      $region10: #{tpu_custom_call.1} parent=5 // pred_check_branch
        %129 = sbr.rel (%p126) target = $region12
      $region11: #{tpu_custom_call.1} parent=5 // pred_region
        %s130 = ssub.s32 %s12, 1
      $region12: #{tpu_custom_call.1} parent=5 // pred_fallthru
        _
      %p131 = scmp.lt.s32.totalorder %s12, 2
      // Predicated region
      $region13: #{tpu_custom_call.1} parent=5 // pred_check
        %p132 = pneg %p131
      $region14: #{tpu_custom_call.1} parent=5 // pred_check_branch
        %134 = sbr.rel (%p132) target = $region16
      $region15: #{tpu_custom_call.1} parent=5 // pred_region
        // Predicated region
        $region17: #{tpu_custom_call.1} parent=15 // pred_check
          %p135 = pneg %p32
        $region18: #{tpu_custom_call.1} parent=15 // pred_check_branch
          %137 = sbr.rel (%p135) target = $region20
        $region19: #{tpu_custom_call.1} parent=15 // pred_region
          %s138 = smul.u32 32, %s12
          %p139 = scmp.lt.s32.totalorder %s138, 63
          %s140 = scalar_select %p139, %s138, 63
          %s141 = smul.addr %s140, 8
          %s142 = scalar_lea.vmem %s0, %s141
          %s143 = smul.u32 32, %s12
        $region20: #{tpu_custom_call.1} parent=15 // pred_fallthru
          _
        // Predicated region
        $region21: #{tpu_custom_call.1} parent=15 // pred_check
          %p144 = pneg %p58
        $region22: #{tpu_custom_call.1} parent=15 // pred_check_branch
          %146 = sbr.rel (%p144) target = $region24
        $region23: #{tpu_custom_call.1} parent=15 // pred_region
          %s147 = smul.u32 32, %s12
          %p148 = scmp.lt.s32.totalorder %s147, 63
          %s149 = scalar_select %p148, %s147, 63
          %s150 = smul.addr %s149, 8
          %s151 = scalar_lea.vmem %s1, %s150
          %s152 = smul.u32 32, %s12
        $region24: #{tpu_custom_call.1} parent=15 // pred_fallthru
          _
        // Predicated region
        $region25: #{tpu_custom_call.1} parent=15 // pred_check
          %p153 = pneg %p84
        $region26: #{tpu_custom_call.1} parent=15 // pred_check_branch
          %155 = sbr.rel (%p153) target = $region28
        $region27: #{tpu_custom_call.1} parent=15 // pred_region
          %s156 = smul.u32 32, %s12
          %p157 = scmp.lt.s32.totalorder %s156, 63
          %s158 = scalar_select %p157, %s156, 63
          %s159 = smul.addr %s158, 8
          %s160 = scalar_lea.vmem %s2, %s159
          %s161 = smul.u32 32, %s12
        $region28: #{tpu_custom_call.1} parent=15 // pred_fallthru
          _
      $region16: #{tpu_custom_call.1} parent=5 // pred_fallthru
        _
      %p162 = scmp.le.s32.totalorder 1, %s12
      %p163 = scmp.lt.s32.totalorder %s12, 3
      %p164 = pnand %p162, %p163
      %p165 = pneg %p164
      // Predicated region
      $region29: #{tpu_custom_call.1} parent=5 // pred_check
        _
      $region30: #{tpu_custom_call.1} parent=5 // pred_check_branch
        %167 = sbr.rel (%p164) target = $region32
      $region31: #{tpu_custom_call.1} parent=5 // pred_region
        %s168 = ssub.s32 %s12, 1
        %s169 = smul.u32 32, %s17
        %p170 = scmp.lt.s32.totalorder %s169, 63
        %s171 = scalar_select %p170, %s169, 63
        %s172 = smul.addr %s171, 8
        %s173 = scalar_lea.vmem %s0, %s172
        %p174 = pneg %p38
        %p175 = pneg %p35
        %s176 = smul.u32 32, %s17
        %p177 = scmp.lt.s32.totalorder %s176, 63
        %s178 = scalar_select %p177, %s176, 63
        %s179 = smul.addr %s178, 8
        %s180 = scalar_lea.vmem %s1, %s179
        %p181 = pneg %p64
        %p182 = pneg %p61
        %s183 = smul.u32 32, %s17
        %p184 = scmp.lt.s32.totalorder %s183, 63
        %s185 = scalar_select %p184, %s183, 63
        %s186 = smul.addr %s185, 8
        %s187 = scalar_lea.vmem %s2, %s186
        %p188 = pneg %p90
        %p189 = pneg %p87
        %p190 = pneg %p116
        %p191 = pneg %p113
        %s192 = sand.u32 %s103, 1
        %s193 = scalar_lea.sflag [#allocation3], %s192
        %s194 = sand.u32 %s103, 1
        %s195 = smul.addr %s194, 4
        %s196 = scalar_lea.vmem [#allocation2], %s195
        %s197 = smul.u32 32, %s17
        %p198 = scmp.lt.s32.totalorder %s197, 63
        %s199 = scalar_select %p198, %s197, 63
        %s200 = smul.addr %s199, 8
        %s201 = scalar_lea.vmem %s0, %s200
        %s202 = smul.u32 32, %s17
        %s203 = smul.u32 32, %s17
        %p204 = scmp.lt.s32.totalorder %s203, 63
        %s205 = scalar_select %p204, %s203, 63
        %s206 = smul.addr %s205, 8
        %s207 = scalar_lea.vmem %s1, %s206
        %s208 = smul.u32 32, %s17
        %s209 = smul.u32 32, %s17
        %p210 = scmp.lt.s32.totalorder %s209, 63
        %s211 = scalar_select %p210, %s209, 63
        %s212 = smul.addr %s211, 8
        %s213 = scalar_lea.vmem %s2, %s212
        %s214 = smul.u32 32, %s17
        %s215 = smul.u32 2, %s17
        %v216 = vld [vmem:[%s201] sm:$0xff]
        %v217 = vld [vmem:[%s201 + $0x8] sm:$0xff]
        %v218 = vld [vmem:[%s201 + $0x10] sm:$0xff]
        %v219 = vld [vmem:[%s201 + $0x18] sm:$0xff]
        %v220 = vld [vmem:[%s201 + $0x20] sm:$0xff]
        %v221 = vld [vmem:[%s201 + $0x28] sm:$0xff]
        %v222 = vld [vmem:[%s201 + $0x30] sm:$0xff]
        %v223 = vld [vmem:[%s201 + $0x38] sm:$0xff]
        %v224 = vld [vmem:[%s201 + $0x40] sm:$0xff]
        %v225 = vld [vmem:[%s201 + $0x48] sm:$0xff]
        %v226 = vld [vmem:[%s201 + $0x50] sm:$0xff]
        %v227 = vld [vmem:[%s201 + $0x58] sm:$0xff]
        %v228 = vld [vmem:[%s201 + $0x60] sm:$0xff]
        %v229 = vld [vmem:[%s201 + $0x68] sm:$0xff]
        %v230 = vld [vmem:[%s201 + $0x70] sm:$0xff]
        %v231 = vld [vmem:[%s201 + $0x78] sm:$0xff]
        %v232 = vld [vmem:[%s201 + $0x80] sm:$0xff]
        %v233 = vld [vmem:[%s201 + $0x88] sm:$0xff]
        %v234 = vld [vmem:[%s201 + $0x90] sm:$0xff]
        %v235 = vld [vmem:[%s201 + $0x98] sm:$0xff]
        %v236 = vld [vmem:[%s201 + $0xa0] sm:$0xff]
        %v237 = vld [vmem:[%s201 + $0xa8] sm:$0xff]
        %v238 = vld [vmem:[%s201 + $0xb0] sm:$0xff]
        %v239 = vld [vmem:[%s201 + $0xb8] sm:$0xff]
        %v240 = vld [vmem:[%s201 + $0xc0] sm:$0xff]
        %v241 = vld [vmem:[%s201 + $0xc8] sm:$0xff]
        %v242 = vld [vmem:[%s201 + $0xd0] sm:$0xff]
        %v243 = vld [vmem:[%s201 + $0xd8] sm:$0xff]
        %v244 = vld [vmem:[%s201 + $0xe0] sm:$0xff]
        %v245 = vld [vmem:[%s201 + $0xe8] sm:$0xff]
        %v246 = vld [vmem:[%s201 + $0xf0] sm:$0xff]
        %v247 = vld [vmem:[%s201 + $0xf8] sm:$0xff]
        %v248 = vld [vmem:[%s207] sm:$0xff]
        %v249 = vld [vmem:[%s207 + $0x8] sm:$0xff]
        %v250 = vld [vmem:[%s207 + $0x10] sm:$0xff]
        %v251 = vld [vmem:[%s207 + $0x18] sm:$0xff]
        %v252 = vld [vmem:[%s207 + $0x20] sm:$0xff]
        %v253 = vld [vmem:[%s207 + $0x28] sm:$0xff]
        %v254 = vld [vmem:[%s207 + $0x30] sm:$0xff]
        %v255 = vld [vmem:[%s207 + $0x38] sm:$0xff]
        %v256 = vld [vmem:[%s207 + $0x40] sm:$0xff]
        %v257 = vld [vmem:[%s207 + $0x48] sm:$0xff]
        %v258 = vld [vmem:[%s207 + $0x50] sm:$0xff]
        %v259 = vld [vmem:[%s207 + $0x58] sm:$0xff]
        %v260 = vld [vmem:[%s207 + $0x60] sm:$0xff]
        %v261 = vld [vmem:[%s207 + $0x68] sm:$0xff]
        %v262 = vld [vmem:[%s207 + $0x70] sm:$0xff]
        %v263 = vld [vmem:[%s207 + $0x78] sm:$0xff]
        %v264 = vld [vmem:[%s207 + $0x80] sm:$0xff]
        %v265 = vld [vmem:[%s207 + $0x88] sm:$0xff]
        %v266 = vld [vmem:[%s207 + $0x90] sm:$0xff]
        %v267 = vld [vmem:[%s207 + $0x98] sm:$0xff]
        %v268 = vld [vmem:[%s207 + $0xa0] sm:$0xff]
        %v269 = vld [vmem:[%s207 + $0xa8] sm:$0xff]
        %v270 = vld [vmem:[%s207 + $0xb0] sm:$0xff]
        %v271 = vld [vmem:[%s207 + $0xb8] sm:$0xff]
        %v272 = vld [vmem:[%s207 + $0xc0] sm:$0xff]
        %v273 = vld [vmem:[%s207 + $0xc8] sm:$0xff]
        %v274 = vld [vmem:[%s207 + $0xd0] sm:$0xff]
        %v275 = vld [vmem:[%s207 + $0xd8] sm:$0xff]
        %v276 = vld [vmem:[%s207 + $0xe0] sm:$0xff]
        %v277 = vld [vmem:[%s207 + $0xe8] sm:$0xff]
        %v278 = vld [vmem:[%s207 + $0xf0] sm:$0xff]
        %v279 = vld [vmem:[%s207 + $0xf8] sm:$0xff]
        %v280 = vld [vmem:[%s213] sm:$0xff]
        %v281 = vld [vmem:[%s213 + $0x8] sm:$0xff]
        %v282 = vld [vmem:[%s213 + $0x10] sm:$0xff]
        %v283 = vld [vmem:[%s213 + $0x18] sm:$0xff]
        %v284 = vld [vmem:[%s213 + $0x20] sm:$0xff]
        %v285 = vld [vmem:[%s213 + $0x28] sm:$0xff]
        %v286 = vld [vmem:[%s213 + $0x30] sm:$0xff]
        %v287 = vld [vmem:[%s213 + $0x38] sm:$0xff]
        %v288 = vld [vmem:[%s213 + $0x40] sm:$0xff]
        %v289 = vld [vmem:[%s213 + $0x48] sm:$0xff]
        %v290 = vld [vmem:[%s213 + $0x50] sm:$0xff]
        %v291 = vld [vmem:[%s213 + $0x58] sm:$0xff]
        %v292 = vld [vmem:[%s213 + $0x60] sm:$0xff]
        %v293 = vld [vmem:[%s213 + $0x68] sm:$0xff]
        %v294 = vld [vmem:[%s213 + $0x70] sm:$0xff]
        %v295 = vld [vmem:[%s213 + $0x78] sm:$0xff]
        %v296 = vld [vmem:[%s213 + $0x80] sm:$0xff]
        %v297 = vld [vmem:[%s213 + $0x88] sm:$0xff]
        %v298 = vld [vmem:[%s213 + $0x90] sm:$0xff]
        %v299 = vld [vmem:[%s213 + $0x98] sm:$0xff]
        %v300 = vld [vmem:[%s213 + $0xa0] sm:$0xff]
        %v301 = vld [vmem:[%s213 + $0xa8] sm:$0xff]
        %v302 = vld [vmem:[%s213 + $0xb0] sm:$0xff]
        %v303 = vld [vmem:[%s213 + $0xb8] sm:$0xff]
        %v304 = vld [vmem:[%s213 + $0xc0] sm:$0xff]
        %v305 = vld [vmem:[%s213 + $0xc8] sm:$0xff]
        %v306 = vld [vmem:[%s213 + $0xd0] sm:$0xff]
        %v307 = vld [vmem:[%s213 + $0xd8] sm:$0xff]
        %v308 = vld [vmem:[%s213 + $0xe0] sm:$0xff]
        %v309 = vld [vmem:[%s213 + $0xe8] sm:$0xff]
        %v310 = vld [vmem:[%s213 + $0xf0] sm:$0xff]
        %v311 = vld [vmem:[%s213 + $0xf8] sm:$0xff]
        %v312 = vmul.f32 %v216, %v248
        %v313 = vmul.f32 %v217, %v249
        %v314 = vmul.f32 %v218, %v250
        %v315 = vmul.f32 %v219, %v251
        %v316 = vmul.f32 %v220, %v252
        %v317 = vmul.f32 %v221, %v253
        %v318 = vmul.f32 %v222, %v254
        %v319 = vmul.f32 %v223, %v255
        %v320 = vmul.f32 %v224, %v256
        %v321 = vmul.f32 %v225, %v257
        %v322 = vmul.f32 %v226, %v258
        %v323 = vmul.f32 %v227, %v259
        %v324 = vmul.f32 %v228, %v260
        %v325 = vmul.f32 %v229, %v261
        %v326 = vmul.f32 %v230, %v262
        %v327 = vmul.f32 %v231, %v263
        %v328 = vmul.f32 %v232, %v264
        %v329 = vmul.f32 %v233, %v265
        %v330 = vmul.f32 %v234, %v266
        %v331 = vmul.f32 %v235, %v267
        %v332 = vmul.f32 %v236, %v268
        %v333 = vmul.f32 %v237, %v269
        %v334 = vmul.f32 %v238, %v270
        %v335 = vmul.f32 %v239, %v271
        %v336 = vmul.f32 %v240, %v272
        %v337 = vmul.f32 %v241, %v273
        %v338 = vmul.f32 %v242, %v274
        %v339 = vmul.f32 %v243, %v275
        %v340 = vmul.f32 %v244, %v276
        %v341 = vmul.f32 %v245, %v277
        %v342 = vmul.f32 %v246, %v278
        %v343 = vmul.f32 %v247, %v279
        %vm344 = vcmask 523264
        %v345 = vsel %vm344, %v312, 0.0
        %346 = vadd.xlane.f32.xlu0 %v345
        %v347 = vpop.xlane.xlu0 %346
        %v348 = vsel %vm344, %v313, 0.0
        %349 = vadd.xlane.f32.xlu0 %v348
        %v350 = vpop.xlane.xlu0 %349
        %v351 = vsel %vm344, %v314, 0.0
        %352 = vadd.xlane.f32.xlu0 %v351
        %v353 = vpop.xlane.xlu0 %352
        %v354 = vsel %vm344, %v315, 0.0
        %355 = vadd.xlane.f32.xlu0 %v354
        %v356 = vpop.xlane.xlu0 %355
        %v357 = vsel %vm344, %v316, 0.0
        %358 = vadd.xlane.f32.xlu0 %v357
        %v359 = vpop.xlane.xlu0 %358
        %v360 = vsel %vm344, %v317, 0.0
        %361 = vadd.xlane.f32.xlu0 %v360
        %v362 = vpop.xlane.xlu0 %361
        %v363 = vsel %vm344, %v318, 0.0
        %364 = vadd.xlane.f32.xlu0 %v363
        %v365 = vpop.xlane.xlu0 %364
        %v366 = vsel %vm344, %v319, 0.0
        %367 = vadd.xlane.f32.xlu0 %v366
        %v368 = vpop.xlane.xlu0 %367
        %v369 = vsel %vm344, %v320, 0.0
        %370 = vadd.xlane.f32.xlu0 %v369
        %v371 = vpop.xlane.xlu0 %370
        %v372 = vsel %vm344, %v321, 0.0
        %373 = vadd.xlane.f32.xlu0 %v372
        %v374 = vpop.xlane.xlu0 %373
        %v375 = vsel %vm344, %v322, 0.0
        %376 = vadd.xlane.f32.xlu0 %v375
        %v377 = vpop.xlane.xlu0 %376
        %v378 = vsel %vm344, %v323, 0.0
        %379 = vadd.xlane.f32.xlu0 %v378
        %v380 = vpop.xlane.xlu0 %379
        %v381 = vsel %vm344, %v324, 0.0
        %382 = vadd.xlane.f32.xlu0 %v381
        %v383 = vpop.xlane.xlu0 %382
        %v384 = vsel %vm344, %v325, 0.0
        %385 = vadd.xlane.f32.xlu0 %v384
        %v386 = vpop.xlane.xlu0 %385
        %v387 = vsel %vm344, %v326, 0.0
        %388 = vadd.xlane.f32.xlu0 %v387
        %v389 = vpop.xlane.xlu0 %388
        %v390 = vsel %vm344, %v327, 0.0
        %391 = vadd.xlane.f32.xlu0 %v390
        %v392 = vpop.xlane.xlu0 %391
        %v393 = vsel %vm344, %v328, 0.0
        %394 = vadd.xlane.f32.xlu0 %v393
        %v395 = vpop.xlane.xlu0 %394
        %v396 = vsel %vm344, %v329, 0.0
        %397 = vadd.xlane.f32.xlu0 %v396
        %v398 = vpop.xlane.xlu0 %397
        %v399 = vsel %vm344, %v330, 0.0
        %400 = vadd.xlane.f32.xlu0 %v399
        %v401 = vpop.xlane.xlu0 %400
        %v402 = vsel %vm344, %v331, 0.0
        %403 = vadd.xlane.f32.xlu0 %v402
        %v404 = vpop.xlane.xlu0 %403
        %v405 = vsel %vm344, %v332, 0.0
        %406 = vadd.xlane.f32.xlu0 %v405
        %v407 = vpop.xlane.xlu0 %406
        %v408 = vsel %vm344, %v333, 0.0
        %409 = vadd.xlane.f32.xlu0 %v408
        %v410 = vpop.xlane.xlu0 %409
        %v411 = vsel %vm344, %v334, 0.0
        %412 = vadd.xlane.f32.xlu0 %v411
        %v413 = vpop.xlane.xlu0 %412
        %v414 = vsel %vm344, %v335, 0.0
        %415 = vadd.xlane.f32.xlu0 %v414
        %v416 = vpop.xlane.xlu0 %415
        %v417 = vsel %vm344, %v336, 0.0
        %418 = vadd.xlane.f32.xlu0 %v417
        %v419 = vpop.xlane.xlu0 %418
        %v420 = vsel %vm344, %v337, 0.0
        %421 = vadd.xlane.f32.xlu0 %v420
        %v422 = vpop.xlane.xlu0 %421
        %v423 = vsel %vm344, %v338, 0.0
        %424 = vadd.xlane.f32.xlu0 %v423
        %v425 = vpop.xlane.xlu0 %424
        %v426 = vsel %vm344, %v339, 0.0
        %427 = vadd.xlane.f32.xlu0 %v426
        %v428 = vpop.xlane.xlu0 %427
        %v429 = vsel %vm344, %v340, 0.0
        %430 = vadd.xlane.f32.xlu0 %v429
        %v431 = vpop.xlane.xlu0 %430
        %v432 = vsel %vm344, %v341, 0.0
        %433 = vadd.xlane.f32.xlu0 %v432
        %v434 = vpop.xlane.xlu0 %433
        %v435 = vsel %vm344, %v342, 0.0
        %436 = vadd.xlane.f32.xlu0 %v435
        %v437 = vpop.xlane.xlu0 %436
        %v438 = vsel %vm344, %v343, 0.0
        %439 = vadd.xlane.f32.xlu0 %v438
        %v440 = vpop.xlane.xlu0 %439
        %v441 = vmul.f32 %v216, %v280
        %v442 = vmul.f32 %v217, %v281
        %v443 = vmul.f32 %v218, %v282
        %v444 = vmul.f32 %v219, %v283
        %v445 = vmul.f32 %v220, %v284
        %v446 = vmul.f32 %v221, %v285
        %v447 = vmul.f32 %v222, %v286
        %v448 = vmul.f32 %v223, %v287
        %v449 = vmul.f32 %v224, %v288
        %v450 = vmul.f32 %v225, %v289
        %v451 = vmul.f32 %v226, %v290
        %v452 = vmul.f32 %v227, %v291
        %v453 = vmul.f32 %v228, %v292
        %v454 = vmul.f32 %v229, %v293
        %v455 = vmul.f32 %v230, %v294
        %v456 = vmul.f32 %v231, %v295
        %v457 = vmul.f32 %v232, %v296
        %v458 = vmul.f32 %v233, %v297
        %v459 = vmul.f32 %v234, %v298
        %v460 = vmul.f32 %v235, %v299
        %v461 = vmul.f32 %v236, %v300
        %v462 = vmul.f32 %v237, %v301
        %v463 = vmul.f32 %v238, %v302
        %v464 = vmul.f32 %v239, %v303
        %v465 = vmul.f32 %v240, %v304
        %v466 = vmul.f32 %v241, %v305
        %v467 = vmul.f32 %v242, %v306
        %v468 = vmul.f32 %v243, %v307
        %v469 = vmul.f32 %v244, %v308
        %v470 = vmul.f32 %v245, %v309
        %v471 = vmul.f32 %v246, %v310
        %v472 = vmul.f32 %v247, %v311
        %v473 = vsel %vm344, %v441, 0.0
        %474 = vadd.xlane.f32.xlu0 %v473
        %v475 = vpop.xlane.xlu0 %474
        %v476 = vsel %vm344, %v442, 0.0
        %477 = vadd.xlane.f32.xlu0 %v476
        %v478 = vpop.xlane.xlu0 %477
        %v479 = vsel %vm344, %v443, 0.0
        %480 = vadd.xlane.f32.xlu0 %v479
        %v481 = vpop.xlane.xlu0 %480
        %v482 = vsel %vm344, %v444, 0.0
        %483 = vadd.xlane.f32.xlu0 %v482
        %v484 = vpop.xlane.xlu0 %483
        %v485 = vsel %vm344, %v445, 0.0
        %486 = vadd.xlane.f32.xlu0 %v485
        %v487 = vpop.xlane.xlu0 %486
        %v488 = vsel %vm344, %v446, 0.0
        %489 = vadd.xlane.f32.xlu0 %v488
        %v490 = vpop.xlane.xlu0 %489
        %v491 = vsel %vm344, %v447, 0.0
        %492 = vadd.xlane.f32.xlu0 %v491
        %v493 = vpop.xlane.xlu0 %492
        %v494 = vsel %vm344, %v448, 0.0
        %495 = vadd.xlane.f32.xlu0 %v494
        %v496 = vpop.xlane.xlu0 %495
        %v497 = vsel %vm344, %v449, 0.0
        %498 = vadd.xlane.f32.xlu0 %v497
        %v499 = vpop.xlane.xlu0 %498
        %v500 = vsel %vm344, %v450, 0.0
        %501 = vadd.xlane.f32.xlu0 %v500
        %v502 = vpop.xlane.xlu0 %501
        %v503 = vsel %vm344, %v451, 0.0
        %504 = vadd.xlane.f32.xlu0 %v503
        %v505 = vpop.xlane.xlu0 %504
        %v506 = vsel %vm344, %v452, 0.0
        %507 = vadd.xlane.f32.xlu0 %v506
        %v508 = vpop.xlane.xlu0 %507
        %v509 = vsel %vm344, %v453, 0.0
        %510 = vadd.xlane.f32.xlu0 %v509
        %v511 = vpop.xlane.xlu0 %510
        %v512 = vsel %vm344, %v454, 0.0
        %513 = vadd.xlane.f32.xlu0 %v512
        %v514 = vpop.xlane.xlu0 %513
        %v515 = vsel %vm344, %v455, 0.0
        %516 = vadd.xlane.f32.xlu0 %v515
        %v517 = vpop.xlane.xlu0 %516
        %v518 = vsel %vm344, %v456, 0.0
        %519 = vadd.xlane.f32.xlu0 %v518
        %v520 = vpop.xlane.xlu0 %519
        %v521 = vsel %vm344, %v457, 0.0
        %522 = vadd.xlane.f32.xlu0 %v521
        %v523 = vpop.xlane.xlu0 %522
        %v524 = vsel %vm344, %v458, 0.0
        %525 = vadd.xlane.f32.xlu0 %v524
        %v526 = vpop.xlane.xlu0 %525
        %v527 = vsel %vm344, %v459, 0.0
        %528 = vadd.xlane.f32.xlu0 %v527
        %v529 = vpop.xlane.xlu0 %528
        %v530 = vsel %vm344, %v460, 0.0
        %531 = vadd.xlane.f32.xlu0 %v530
        %v532 = vpop.xlane.xlu0 %531
        %v533 = vsel %vm344, %v461, 0.0
        %534 = vadd.xlane.f32.xlu0 %v533
        %v535 = vpop.xlane.xlu0 %534
        %v536 = vsel %vm344, %v462, 0.0
        %537 = vadd.xlane.f32.xlu0 %v536
        %v538 = vpop.xlane.xlu0 %537
        %v539 = vsel %vm344, %v463, 0.0
        %540 = vadd.xlane.f32.xlu0 %v539
        %v541 = vpop.xlane.xlu0 %540
        %v542 = vsel %vm344, %v464, 0.0
        %543 = vadd.xlane.f32.xlu0 %v542
        %v544 = vpop.xlane.xlu0 %543
        %v545 = vsel %vm344, %v465, 0.0
        %546 = vadd.xlane.f32.xlu0 %v545
        %v547 = vpop.xlane.xlu0 %546
        %v548 = vsel %vm344, %v466, 0.0
        %549 = vadd.xlane.f32.xlu0 %v548
        %v550 = vpop.xlane.xlu0 %549
        %v551 = vsel %vm344, %v467, 0.0
        %552 = vadd.xlane.f32.xlu0 %v551
        %v553 = vpop.xlane.xlu0 %552
        %v554 = vsel %vm344, %v468, 0.0
        %555 = vadd.xlane.f32.xlu0 %v554
        %v556 = vpop.xlane.xlu0 %555
        %v557 = vsel %vm344, %v469, 0.0
        %558 = vadd.xlane.f32.xlu0 %v557
        %v559 = vpop.xlane.xlu0 %558
        %v560 = vsel %vm344, %v470, 0.0
        %561 = vadd.xlane.f32.xlu0 %v560
        %v562 = vpop.xlane.xlu0 %561
        %v563 = vsel %vm344, %v471, 0.0
        %564 = vadd.xlane.f32.xlu0 %v563
        %v565 = vpop.xlane.xlu0 %564
        %v566 = vsel %vm344, %v472, 0.0
        %567 = vadd.xlane.f32.xlu0 %v566
        %v568 = vpop.xlane.xlu0 %567
        %v601 = vlaneseq
        %v602 = vand.u32 %v601, 127
        %v603 = vlaneseq
        %v604 = vshrl.u32 %v603, 7
        %v605 = vsub.s32 %v602, %v604
        %v606 = vrot.slane %v347, %v605
        %v607 = vadd.s32 %v602, 4294967288
        %v608 = vlaneseq
        %v609 = vshrl.u32 %v608, 7
        %v610 = vsub.s32 %v607, %v609
        %v611 = vrot.slane %v350, %v610
        %vm612 = vcmask 130112
        %v613 = vsel %vm612, %v611, %v606
        %v614 = vadd.s32 %v602, 4294967280
        %v615 = vlaneseq
        %v616 = vshrl.u32 %v615, 7
        %v617 = vsub.s32 %v614, %v616
        %v618 = vrot.slane %v353, %v617
        %vm619 = vcmask 195712
        %v620 = vsel %vm619, %v618, %v613
        %v621 = vadd.s32 %v602, 4294967272
        %v622 = vlaneseq
        %v623 = vshrl.u32 %v622, 7
        %v624 = vsub.s32 %v621, %v623
        %v625 = vrot.slane %v356, %v624
        %vm626 = vcmask 261312
        %v627 = vsel %vm626, %v625, %v620
        %v628 = vadd.s32 %v602, 4294967264
        %v629 = vlaneseq
        %v630 = vshrl.u32 %v629, 7
        %v631 = vsub.s32 %v628, %v630
        %v632 = vrot.slane %v359, %v631
        %vm633 = vcmask 326912
        %v634 = vsel %vm633, %v632, %v627
        %v635 = vadd.s32 %v602, 4294967256
        %v636 = vlaneseq
        %v637 = vshrl.u32 %v636, 7
        %v638 = vsub.s32 %v635, %v637
        %v639 = vrot.slane %v362, %v638
        %vm640 = vcmask 392512
        %v641 = vsel %vm640, %v639, %v634
        %v642 = vadd.s32 %v602, 4294967248
        %v643 = vlaneseq
        %v644 = vshrl.u32 %v643, 7
        %v645 = vsub.s32 %v642, %v644
        %v646 = vrot.slane %v365, %v645
        %vm647 = vcmask 458112
        %v648 = vsel %vm647, %v646, %v641
        %v649 = vadd.s32 %v602, 4294967240
        %v650 = vlaneseq
        %v651 = vshrl.u32 %v650, 7
        %v652 = vsub.s32 %v649, %v651
        %v653 = vrot.slane %v368, %v652
        %vm654 = vcmask 523712
        %v655 = vsel %vm654, %v653, %v648
        %v656 = vadd.s32 %v602, 4294967232
        %v657 = vlaneseq
        %v658 = vshrl.u32 %v657, 7
        %v659 = vsub.s32 %v656, %v658
        %v660 = vrot.slane %v371, %v659
        %vm661 = vcmask 589312
        %v662 = vsel %vm661, %v660, %v655
        %v663 = vadd.s32 %v602, 4294967224
        %v664 = vlaneseq
        %v665 = vshrl.u32 %v664, 7
        %v666 = vsub.s32 %v663, %v665
        %v667 = vrot.slane %v374, %v666
        %vm668 = vcmask 654912
        %v669 = vsel %vm668, %v667, %v662
        %v670 = vadd.s32 %v602, 4294967216
        %v671 = vlaneseq
        %v672 = vshrl.u32 %v671, 7
        %v673 = vsub.s32 %v670, %v672
        %v674 = vrot.slane %v377, %v673
        %vm675 = vcmask 720512
        %v676 = vsel %vm675, %v674, %v669
        %v677 = vadd.s32 %v602, 4294967208
        %v678 = vlaneseq
        %v679 = vshrl.u32 %v678, 7
        %v680 = vsub.s32 %v677, %v679
        %v681 = vrot.slane %v380, %v680
        %vm682 = vcmask 786112
        %v683 = vsel %vm682, %v681, %v676
        %v684 = vadd.s32 %v602, 4294967200
        %v685 = vlaneseq
        %v686 = vshrl.u32 %v685, 7
        %v687 = vsub.s32 %v684, %v686
        %v688 = vrot.slane %v383, %v687
        %vm689 = vcmask 851712
        %v690 = vsel %vm689, %v688, %v683
        %v691 = vadd.s32 %v602, 4294967192
        %v692 = vlaneseq
        %v693 = vshrl.u32 %v692, 7
        %v694 = vsub.s32 %v691, %v693
        %v695 = vrot.slane %v386, %v694
        %vm696 = vcmask 917312
        %v697 = vsel %vm696, %v695, %v690
        %v698 = vadd.s32 %v602, 4294967184
        %v699 = vlaneseq
        %v700 = vshrl.u32 %v699, 7
        %v701 = vsub.s32 %v698, %v700
        %v702 = vrot.slane %v389, %v701
        %vm703 = vcmask 982912
        %v704 = vsel %vm703, %v702, %v697
        %v705 = vadd.s32 %v602, 4294967176
        %v706 = vlaneseq
        %v707 = vshrl.u32 %v706, 7
        %v708 = vsub.s32 %v705, %v707
        %v709 = vrot.slane %v392, %v708
        %vm710 = vcmask 1048512
        %v711 = vsel %vm710, %v709, %v704
        %v712 = vlaneseq
        %v713 = vshrl.u32 %v712, 7
        %v714 = vsub.s32 %v602, %v713
        %v715 = vrot.slane %v395, %v714
        %v716 = vlaneseq
        %v717 = vshrl.u32 %v716, 7
        %v718 = vsub.s32 %v607, %v717
        %v719 = vrot.slane %v398, %v718
        %v720 = vsel %vm612, %v719, %v715
        %v721 = vlaneseq
        %v722 = vshrl.u32 %v721, 7
        %v723 = vsub.s32 %v614, %v722
        %v724 = vrot.slane %v401, %v723
        %v725 = vsel %vm619, %v724, %v720
        %v726 = vlaneseq
        %v727 = vshrl.u32 %v726, 7
        %v728 = vsub.s32 %v621, %v727
        %v729 = vrot.slane %v404, %v728
        %v730 = vsel %vm626, %v729, %v725
        %v731 = vlaneseq
        %v732 = vshrl.u32 %v731, 7
        %v733 = vsub.s32 %v628, %v732
        %v734 = vrot.slane %v407, %v733
        %v735 = vsel %vm633, %v734, %v730
        %v736 = vlaneseq
        %v737 = vshrl.u32 %v736, 7
        %v738 = vsub.s32 %v635, %v737
        %v739 = vrot.slane %v410, %v738
        %v740 = vsel %vm640, %v739, %v735
        %v741 = vlaneseq
        %v742 = vshrl.u32 %v741, 7
        %v743 = vsub.s32 %v642, %v742
        %v744 = vrot.slane %v413, %v743
        %v745 = vsel %vm647, %v744, %v740
        %v746 = vlaneseq
        %v747 = vshrl.u32 %v746, 7
        %v748 = vsub.s32 %v649, %v747
        %v749 = vrot.slane %v416, %v748
        %v750 = vsel %vm654, %v749, %v745
        %v751 = vlaneseq
        %v752 = vshrl.u32 %v751, 7
        %v753 = vsub.s32 %v656, %v752
        %v754 = vrot.slane %v419, %v753
        %v755 = vsel %vm661, %v754, %v750
        %v756 = vlaneseq
        %v757 = vshrl.u32 %v756, 7
        %v758 = vsub.s32 %v663, %v757
        %v759 = vrot.slane %v422, %v758
        %v760 = vsel %vm668, %v759, %v755
        %v761 = vlaneseq
        %v762 = vshrl.u32 %v761, 7
        %v763 = vsub.s32 %v670, %v762
        %v764 = vrot.slane %v425, %v763
        %v765 = vsel %vm675, %v764, %v760
        %v766 = vlaneseq
        %v767 = vshrl.u32 %v766, 7
        %v768 = vsub.s32 %v677, %v767
        %v769 = vrot.slane %v428, %v768
        %v770 = vsel %vm682, %v769, %v765
        %v771 = vlaneseq
        %v772 = vshrl.u32 %v771, 7
        %v773 = vsub.s32 %v684, %v772
        %v774 = vrot.slane %v431, %v773
        %v775 = vsel %vm689, %v774, %v770
        %v776 = vlaneseq
        %v777 = vshrl.u32 %v776, 7
        %v778 = vsub.s32 %v691, %v777
        %v779 = vrot.slane %v434, %v778
        %v780 = vsel %vm696, %v779, %v775
        %v781 = vlaneseq
        %v782 = vshrl.u32 %v781, 7
        %v783 = vsub.s32 %v698, %v782
        %v784 = vrot.slane %v437, %v783
        %v785 = vsel %vm703, %v784, %v780
        %v786 = vlaneseq
        %v787 = vshrl.u32 %v786, 7
        %v788 = vsub.s32 %v705, %v787
        %v789 = vrot.slane %v440, %v788
        %v790 = vsel %vm710, %v789, %v785
        %v825 = vlaneseq
        %v826 = vshrl.u32 %v825, 7
        %v827 = vsub.s32 %v602, %v826
        %v828 = vrot.slane %v475, %v827
        %v829 = vlaneseq
        %v830 = vshrl.u32 %v829, 7
        %v831 = vsub.s32 %v607, %v830
        %v832 = vrot.slane %v478, %v831
        %v833 = vsel %vm612, %v832, %v828
        %v834 = vlaneseq
        %v835 = vshrl.u32 %v834, 7
        %v836 = vsub.s32 %v614, %v835
        %v837 = vrot.slane %v481, %v836
        %v838 = vsel %vm619, %v837, %v833
        %v839 = vlaneseq
        %v840 = vshrl.u32 %v839, 7
        %v841 = vsub.s32 %v621, %v840
        %v842 = vrot.slane %v484, %v841
        %v843 = vsel %vm626, %v842, %v838
        %v844 = vlaneseq
        %v845 = vshrl.u32 %v844, 7
        %v846 = vsub.s32 %v628, %v845
        %v847 = vrot.slane %v487, %v846
        %v848 = vsel %vm633, %v847, %v843
        %v849 = vlaneseq
        %v850 = vshrl.u32 %v849, 7
        %v851 = vsub.s32 %v635, %v850
        %v852 = vrot.slane %v490, %v851
        %v853 = vsel %vm640, %v852, %v848
        %v854 = vlaneseq
        %v855 = vshrl.u32 %v854, 7
        %v856 = vsub.s32 %v642, %v855
        %v857 = vrot.slane %v493, %v856
        %v858 = vsel %vm647, %v857, %v853
        %v859 = vlaneseq
        %v860 = vshrl.u32 %v859, 7
        %v861 = vsub.s32 %v649, %v860
        %v862 = vrot.slane %v496, %v861
        %v863 = vsel %vm654, %v862, %v858
        %v864 = vlaneseq
        %v865 = vshrl.u32 %v864, 7
        %v866 = vsub.s32 %v656, %v865
        %v867 = vrot.slane %v499, %v866
        %v868 = vsel %vm661, %v867, %v863
        %v869 = vlaneseq
        %v870 = vshrl.u32 %v869, 7
        %v871 = vsub.s32 %v663, %v870
        %v872 = vrot.slane %v502, %v871
        %v873 = vsel %vm668, %v872, %v868
        %v874 = vlaneseq
        %v875 = vshrl.u32 %v874, 7
        %v876 = vsub.s32 %v670, %v875
        %v877 = vrot.slane %v505, %v876
        %v878 = vsel %vm675, %v877, %v873
        %v879 = vlaneseq
        %v880 = vshrl.u32 %v879, 7
        %v881 = vsub.s32 %v677, %v880
        %v882 = vrot.slane %v508, %v881
        %v883 = vsel %vm682, %v882, %v878
        %v884 = vlaneseq
        %v885 = vshrl.u32 %v884, 7
        %v886 = vsub.s32 %v684, %v885
        %v887 = vrot.slane %v511, %v886
        %v888 = vsel %vm689, %v887, %v883
        %v889 = vlaneseq
        %v890 = vshrl.u32 %v889, 7
        %v891 = vsub.s32 %v691, %v890
        %v892 = vrot.slane %v514, %v891
        %v893 = vsel %vm696, %v892, %v888
        %v894 = vlaneseq
        %v895 = vshrl.u32 %v894, 7
        %v896 = vsub.s32 %v698, %v895
        %v897 = vrot.slane %v517, %v896
        %v898 = vsel %vm703, %v897, %v893
        %v899 = vlaneseq
        %v900 = vshrl.u32 %v899, 7
        %v901 = vsub.s32 %v705, %v900
        %v902 = vrot.slane %v520, %v901
        %v903 = vsel %vm710, %v902, %v898
        %v904 = vlaneseq
        %v905 = vshrl.u32 %v904, 7
        %v906 = vsub.s32 %v602, %v905
        %v907 = vrot.slane %v523, %v906
        %v908 = vlaneseq
        %v909 = vshrl.u32 %v908, 7
        %v910 = vsub.s32 %v607, %v909
        %v911 = vrot.slane %v526, %v910
        %v912 = vsel %vm612, %v911, %v907
        %v913 = vlaneseq
        %v914 = vshrl.u32 %v913, 7
        %v915 = vsub.s32 %v614, %v914
        %v916 = vrot.slane %v529, %v915
        %v917 = vsel %vm619, %v916, %v912
        %v918 = vlaneseq
        %v919 = vshrl.u32 %v918, 7
        %v920 = vsub.s32 %v621, %v919
        %v921 = vrot.slane %v532, %v920
        %v922 = vsel %vm626, %v921, %v917
        %v923 = vlaneseq
        %v924 = vshrl.u32 %v923, 7
        %v925 = vsub.s32 %v628, %v924
        %v926 = vrot.slane %v535, %v925
        %v927 = vsel %vm633, %v926, %v922
        %v928 = vlaneseq
        %v929 = vshrl.u32 %v928, 7
        %v930 = vsub.s32 %v635, %v929
        %v931 = vrot.slane %v538, %v930
        %v932 = vsel %vm640, %v931, %v927
        %v933 = vlaneseq
        %v934 = vshrl.u32 %v933, 7
        %v935 = vsub.s32 %v642, %v934
        %v936 = vrot.slane %v541, %v935
        %v937 = vsel %vm647, %v936, %v932
        %v938 = vlaneseq
        %v939 = vshrl.u32 %v938, 7
        %v940 = vsub.s32 %v649, %v939
        %v941 = vrot.slane %v544, %v940
        %v942 = vsel %vm654, %v941, %v937
        %v943 = vlaneseq
        %v944 = vshrl.u32 %v943, 7
        %v945 = vsub.s32 %v656, %v944
        %v946 = vrot.slane %v547, %v945
        %v947 = vsel %vm661, %v946, %v942
        %v948 = vlaneseq
        %v949 = vshrl.u32 %v948, 7
        %v950 = vsub.s32 %v663, %v949
        %v951 = vrot.slane %v550, %v950
        %v952 = vsel %vm668, %v951, %v947
        %v953 = vlaneseq
        %v954 = vshrl.u32 %v953, 7
        %v955 = vsub.s32 %v670, %v954
        %v956 = vrot.slane %v553, %v955
        %v957 = vsel %vm675, %v956, %v952
        %v958 = vlaneseq
        %v959 = vshrl.u32 %v958, 7
        %v960 = vsub.s32 %v677, %v959
        %v961 = vrot.slane %v556, %v960
        %v962 = vsel %vm682, %v961, %v957
        %v963 = vlaneseq
        %v964 = vshrl.u32 %v963, 7
        %v965 = vsub.s32 %v684, %v964
        %v966 = vrot.slane %v559, %v965
        %v967 = vsel %vm689, %v966, %v962
        %v968 = vlaneseq
        %v969 = vshrl.u32 %v968, 7
        %v970 = vsub.s32 %v691, %v969
        %v971 = vrot.slane %v562, %v970
        %v972 = vsel %vm696, %v971, %v967
        %v973 = vlaneseq
        %v974 = vshrl.u32 %v973, 7
        %v975 = vsub.s32 %v698, %v974
        %v976 = vrot.slane %v565, %v975
        %v977 = vsel %vm703, %v976, %v972
        %v978 = vlaneseq
        %v979 = vshrl.u32 %v978, 7
        %v980 = vsub.s32 %v705, %v979
        %v981 = vrot.slane %v568, %v980
        %v982 = vsel %vm710, %v981, %v977
        %vm985 = vcmask 1040384
        %v986 = vsel %vm985, %v711, %v903
        %v987 = vsel %vm985, %v790, %v982
        %v990 = vcombine.low %v986, %v987
        %v992 = vunpack.c.l.s4 1983009808
        %v993 = vunpack.c.0.s8 %v992
        %v994 = vlaneseq
        %v995 = vshrl.u32 %v994, 7
        %v996 = vsub.s32 %v993, %v995
        %v997 = vrot.slane %v990, %v996
        %999 = vst [vmem:[%s196] sm:$0xf] %v997
        %s1000 = sand.u32 %s103, 1
        %s1001 = scalar_lea.sflag [#allocation3], %s1000
        %s1002 = sand.u32 %s103, 1
        %s1003 = smul.addr %s1002, 4
        %s1004 = scalar_lea.vmem [#allocation2], %s1003
        // Predicated region
        $region33: #{tpu_custom_call.1} parent=31 // pred_check
          %p1005 = pneg %p113
        $region34: #{tpu_custom_call.1} parent=31 // pred_check_branch
          %1007 = sbr.rel (%p1005) target = $region36
        $region35: #{tpu_custom_call.1} parent=31 // pred_region
          %s1008 = smul.u32 2, %s17
          %s1010 = ssub.s32 64, 64
          %1011 = vsyncadd %s1001, %s1010
          %s1012 = smul.addr %s1008, 32
          %s1013 = scalar_lea.hbm %s3, %s1012
          %s1015 = sshll.u32 %s1004, 4
          %s1016 = int_to_ptr.vmem [resolvable:$true] %s1015
          %1018 = dma.vmem_to_hbm [thread:$0]  %s1016, 64, %s1013, %s1001
        $region36: #{tpu_custom_call.1} parent=31 // pred_fallthru
          _
      $region32: #{tpu_custom_call.1} parent=5 // pred_fallthru
        _
      %p1019 = scmp.le.s32.totalorder 2, %s12
      // Predicated region
      $region37: #{tpu_custom_call.1} parent=5 // pred_check
        %p1020 = pneg %p1019
      $region38: #{tpu_custom_call.1} parent=5 // pred_check_branch
        %1022 = sbr.rel (%p1020) target = $region40
      $region39: #{tpu_custom_call.1} parent=5 // pred_region
        %s1023 = ssub.s32 %s12, 2
        // Predicated region
        $region41: #{tpu_custom_call.1} parent=39 // pred_check
          %p1024 = pneg %p119
        $region42: #{tpu_custom_call.1} parent=39 // pred_check_branch
          %1026 = sbr.rel (%p1024) target = $region44
        $region43: #{tpu_custom_call.1} parent=39 // pred_region
          %s1027 = sand.u32 %s104, 1
          %s1028 = scalar_lea.sflag [#allocation3], %s1027
          %s1029 = sand.u32 %s104, 1
          %s1030 = smul.addr %s1029, 4
          %s1031 = scalar_lea.vmem [#allocation2], %s1030
          %1032 = dma.done %s1028, 64
        $region44: #{tpu_custom_call.1} parent=39 // pred_fallthru
          _
      $region40: #{tpu_custom_call.1} parent=5 // pred_fallthru
        _
    $region6: #{tpu_custom_call.1} parent=1 // loop_footer
      %s16 = sadd.s32 1, %s12
    $region7: #{tpu_custom_call.1} parent=1 // loop_footer_branch
      %11 = sbr.rel target = $region3
    $region8: #{tpu_custom_call.1} parent=1 // loop_exit
      _
    %1033 = vsyncpa [#allocation3], 1
    %s1034 = scalar_lea.sflag [#allocation3], 1
    %1035 = vsyncpa %s1034, 1

</llo_original>
